<compile_context>
chip_gen: v5e
topology: v5e:2x2
jax: 0.10.0
libtpu: 0.0.40
codegen_flags: <defaults>
</compile_context>

<pallas_src>
import jax
import jax.numpy as jnp
from jax.experimental import pallas as pl
from jax.experimental.pallas import tpu as pltpu

NEG_SLOPE = 0.01  # torch.nn.LeakyReLU default

_SUBLANE = 16      # multiple of 8 (f32) and 16 (bf16) sublane tiling
_TM_MAX = 2048     # diminishing returns beyond ~1-2K rows per tile


def _round_up(v, m):
    return ((v + m - 1) // m) * m


def _leaky_relu(v):
    return jnp.where(v > 0, v, NEG_SLOPE * v)


def _vmem_budget_bytes():
    """Per-generation VMEM budget: ~3/4 of physical capacity
    (v7x 64 MiB -> 48 MiB limit, v5e/v6e 128 MiB -> 96 MiB limit),
    with a conservative fallback if the query is unavailable."""
    cap = None
    try:
        info = pltpu.get_tpu_info()
        cap = getattr(info, "vmem_capacity_bytes", None)
    except Exception:
        cap = None
    if not cap:
        cap = 64 * 1024 * 1024  # v7x is the smallest; safe everywhere
    limit = (int(cap) * 3) // 4                 # passed as vmem_limit_bytes
    tile_budget = limit - 8 * 1024 * 1024       # headroom for compiler scratch
    return limit, max(tile_budget, 8 * 1024 * 1024)


def _choose_tm(m, c_in, bottleneck, x_itemsize, w_itemsize, out_itemsize,
               tile_budget):
    """Pick a row-tile size TM (multiple of 16)."""
    # Two resident weights, double-buffered (default pipelining), conservative.
    weight_bytes = 2 * (c_in * bottleneck * w_itemsize) * 2
    # Per-row tile bytes: x (input dtype) + hidden + y (output dtype), each
    # double-buffered, plus f32 in-body intermediates for hidden and y rows.
    per_row = (2 * c_in * x_itemsize
               + 2 * bottleneck * out_itemsize
               + 2 * c_in * out_itemsize
               + (c_in + bottleneck) * 4)
    avail = max(tile_budget - weight_bytes, per_row * _SUBLANE)
    tm_cap = min(int(avail // per_row), _TM_MAX)
    tm_cap = max(_SUBLANE, (tm_cap // _SUBLANE) * _SUBLANE)

    # Balance tiles so the last one is nearly full, and keep an even count of
    # at least 2 so v7x's two TensorCores both get work ("parallel" M axis).
    n_tiles = pl.cdiv(m, tm_cap)
    if m >= 2 * _SUBLANE:
        n_tiles = max(n_tiles, 2)
        n_tiles += n_tiles % 2
    tm = _round_up(pl.cdiv(m, n_tiles), _SUBLANE)
    return int(min(tm, tm_cap))


def _clip_adapter_kernel(x_ref, w1_ref, w2_ref, h_ref, y_ref):
    # x_ref : (TM, c_in)         activation tile (original dtype)
    # w1_ref: (c_in, bottleneck) resident weight (compute dtype)
    # w2_ref: (bottleneck, c_in) resident weight (compute dtype)
    # h_ref : (TM, bottleneck)   hidden output tile (torch's returned "x")
    # y_ref : (TM, c_in)         final output tile
    compute_dtype = w1_ref.dtype
    x = x_ref[...].astype(compute_dtype)   # in-VMEM downcast (e.g. f32 -> bf16)

    # fc1 + LeakyReLU: MXU in compute dtype, f32 accumulate, f32 activation.
    h = jnp.dot(x, w1_ref[...], preferred_element_type=jnp.float32)
    h = _leaky_relu(h)
    h_ref[...] = h.astype(h_ref.dtype)

    # fc2 + LeakyReLU, consuming the compute-dtype hidden (bf16-module parity).
    y = jnp.dot(h.astype(compute_dtype), w2_ref[...],
                preferred_element_type=jnp.float32)
    y = _leaky_relu(y)
    y_ref[...] = y.astype(y_ref.dtype)


def prepare_clip_adapter_params(w1, w2, compute_dtype=None):
    """One-time weight prep (hoisted out of the per-call path).

    w1: (bottleneck, c_in)  torch fc1.weight layout;  w2: (c_in, bottleneck).
    Returns (w1_p, w2_p) transposed to (in, out) layout and optionally cast to
    a compute dtype (e.g. jnp.bfloat16 for the bf16 MXU / half-traffic path).
    No zero padding: typical CLIP dims are already lane-aligned; unaligned
    dims use masked stores in the kernel instead of extra HBM copy passes.
    """
    dtype = compute_dtype if compute_dtype is not None else jnp.asarray(w1).dtype
    w1_p = jnp.asarray(w1).T.astype(dtype)  # (c_in, bottleneck)
    w2_p = jnp.asarray(w2).T.astype(dtype)  # (bottleneck, c_in)
    return w1_p, w2_p


def clip_adapter_forward(x, w1_p, w2_p, compute_dtype=None):
    """Fused ClipAdapter forward.

    x    : (..., c_in) activations.
    w1_p : (c_in, bottleneck)  from prepare_clip_adapter_params.
    w2_p : (bottleneck, c_in)  from prepare_clip_adapter_params.
    Returns (hidden, y) matching the PyTorch module's (x, y), in x.dtype.
    """
    orig_shape = x.shape
    c_in = orig_shape[-1]
    c_in_w, bottleneck = w1_p.shape
    if c_in_w != c_in or w2_p.shape != (bottleneck, c_in):
        raise ValueError("weight shapes do not match x's channel dimension")
    if w1_p.dtype != w2_p.dtype:
        raise ValueError("w1_p and w2_p must share a dtype")
    if compute_dtype is not None and jnp.dtype(compute_dtype) != w1_p.dtype:
        raise ValueError(
            "compute_dtype must match the dtype used in "
            f"prepare_clip_adapter_params (got {jnp.dtype(compute_dtype)} vs "
            f"weights {w1_p.dtype}); mixed dtypes silently hit the slow path")

    out_dtype = x.dtype
    m = 1
    for d in orig_shape[:-1]:
        m *= d
    x2d = x.reshape(m, c_in)   # no cast, no pad: x is read from HBM once, in-kernel

    vmem_limit, tile_budget = _vmem_budget_bytes()
    tm = _choose_tm(
        m, c_in, bottleneck,
        x_itemsize=jnp.dtype(x.dtype).itemsize,
        w_itemsize=jnp.dtype(w1_p.dtype).itemsize,
        out_itemsize=jnp.dtype(out_dtype).itemsize,
        tile_budget=tile_budget)
    grid = (pl.cdiv(m, tm),)   # ragged last M tile handled by Pallas

    hidden2d, y2d = pl.pallas_call(
        _clip_adapter_kernel,
        out_shape=(
            jax.ShapeDtypeStruct((m, bottleneck), out_dtype),
            jax.ShapeDtypeStruct((m, c_in), out_dtype),
        ),
        grid=grid,
        in_specs=[
            pl.BlockSpec((tm, c_in), lambda i: (i, 0)),          # x streams over M
            pl.BlockSpec((c_in, bottleneck), lambda i: (0, 0)),  # w1 resident
            pl.BlockSpec((bottleneck, c_in), lambda i: (0, 0)),  # w2 resident
        ],
        out_specs=(
            pl.BlockSpec((tm, bottleneck), lambda i: (i, 0)),
            pl.BlockSpec((tm, c_in), lambda i: (i, 0)),
        ),
        compiler_params=pltpu.CompilerParams(
            dimension_semantics=("parallel",),   # megacore split of M on v7x
            vmem_limit_bytes=vmem_limit,
        ),
    )(x2d, w1_p, w2_p)

    hidden = hidden2d.reshape(*orig_shape[:-1], bottleneck)
    y = y2d.reshape(orig_shape)
    return hidden, y


if __name__ == "__main__":
    # Small shapes consistent with the module: batch=2, seq=8, c_in=32, bottleneck=64.
    B, S, C_IN, BOTTLENECK = 2, 8, 32, 64

    key = jax.random.PRNGKey(0)
    kx, kw1, kw2 = jax.random.split(key, 3)

    x = jax.random.normal(kx, (B, S, C_IN), dtype=jnp.float32)
    # Torch nn.Linear layout: (out_features, in_features).
    w1 = jax.random.normal(kw1, (BOTTLENECK, C_IN), dtype=jnp.float32) * 0.05
    w2 = jax.random.normal(kw2, (C_IN, BOTTLENECK), dtype=jnp.float32) * 0.05

    def leaky(v):
        return jnp.where(v > 0, v, NEG_SLOPE * v)

    ref_h = leaky(x @ w1.T)
    ref_y = leaky(ref_h @ w2.T)

    # ---- f32 path (exact parity with the PyTorch module) ----
    w1_p, w2_p = prepare_clip_adapter_params(w1, w2)
    hidden, y = clip_adapter_forward(x, w1_p, w2_p)
    jax.block_until_ready((hidden, y))
    assert hidden.shape == (B, S, BOTTLENECK)
    assert y.shape == (B, S, C_IN)
    assert jnp.allclose(hidden, ref_h, atol=1e-5, rtol=1e-5)
    assert jnp.allclose(y, ref_y, atol=1e-5, rtol=1e-5)

    # ---- bf16 compute path (halves weight/MXU traffic; f32 accumulate) ----
    w1_bf, w2_bf = prepare_clip_adapter_params(w1, w2, compute_dtype=jnp.bfloat16)
    hidden_bf, y_bf = clip_adapter_forward(x, w1_bf, w2_bf,
                                           compute_dtype=jnp.bfloat16)
    jax.block_until_ready((hidden_bf, y_bf))
    assert hidden_bf.dtype == jnp.float32 and y_bf.dtype == jnp.float32
    assert jnp.allclose(hidden_bf, ref_h, atol=2e-2, rtol=5e-2)
    assert jnp.allclose(y_bf, ref_y, atol=2e-2, rtol=5e-2)

    print("KERNEL_OK")
</pallas_src>

<mosaic_0001>
module attributes {stable_mosaic.version = 11 : i64} {
  func.func @_clip_adapter_kernel(%arg0: i32, %arg1: memref<16x32xf32, #tpu.memory_space<vmem>>, %arg2: memref<32x64xf32, #tpu.memory_space<vmem>>, %arg3: memref<64x32xf32, #tpu.memory_space<vmem>>, %arg4: memref<16x64xf32, #tpu.memory_space<vmem>>, %arg5: memref<16x32xf32, #tpu.memory_space<vmem>>) attributes {dimension_semantics = [#tpu.dimension_semantics<parallel>], iteration_bounds = array<i64: 1>, scalar_prefetch = 0 : i64, scratch_operands = 0 : i64, tpu.core_type = #tpu.core_type<tc>, window_params = [{transform_indices = @transform_0, window_bounds = array<i64: 16, 32>}, {pipeline_mode = #tpu.pipeline_mode<synchronous>, transform_indices = @transform_1, window_bounds = array<i64: 32, 64>}, {pipeline_mode = #tpu.pipeline_mode<synchronous>, transform_indices = @transform_2, window_bounds = array<i64: 64, 32>}, {transform_indices = @transform_3, window_bounds = array<i64: 16, 64>}, {transform_indices = @transform_4, window_bounds = array<i64: 16, 32>}]} {
    %c0 = arith.constant 0 : index
    %c0_0 = arith.constant 0 : index
    %0 = vector.load %arg1[%c0, %c0_0] : memref<16x32xf32, #tpu.memory_space<vmem>>, vector<16x32xf32>
    %c0_1 = arith.constant 0 : index
    %c0_2 = arith.constant 0 : index
    %1 = vector.load %arg2[%c0_1, %c0_2] : memref<32x64xf32, #tpu.memory_space<vmem>>, vector<32x64xf32>
    %cst = arith.constant dense<0.000000e+00> : vector<16x64xf32>
    %2 = tpu.matmul %0, %1, %cst {dimension_numbers = #tpu.dot_dimension_numbers<[1], [0], [0], [1], [0, 0, 1, 1], [], []>} : vector<16x32xf32>, vector<32x64xf32>, vector<16x64xf32> -> vector<16x64xf32>
    %cst_3 = arith.constant 0.000000e+00 : f32
    %3 = vector.broadcast %cst_3 : f32 to vector<16x64xf32>
    %4 = arith.cmpf ogt, %2, %3 : vector<16x64xf32>
    %cst_4 = arith.constant 0.00999999977 : f32
    %5 = vector.broadcast %cst_4 : f32 to vector<16x64xf32>
    %6 = arith.mulf %5, %2 : vector<16x64xf32>
    %7 = arith.select %4, %2, %6 : vector<16x64xi1>, vector<16x64xf32>
    %c0_5 = arith.constant 0 : index
    %c0_6 = arith.constant 0 : index
    %8 = vector.load %arg4[%c0_5, %c0_6] : memref<16x64xf32, #tpu.memory_space<vmem>>, vector<16x64xf32>
    tpu.vector_store %arg4[%c0_5, %c0_6], %7 {strides = array<i32>} : memref<16x64xf32, #tpu.memory_space<vmem>>, vector<16x64xf32>,
    %c0_7 = arith.constant 0 : index
    %c0_8 = arith.constant 0 : index
    %9 = vector.load %arg3[%c0_7, %c0_8] : memref<64x32xf32, #tpu.memory_space<vmem>>, vector<64x32xf32>
    %cst_9 = arith.constant dense<0.000000e+00> : vector<16x32xf32>
    %10 = tpu.matmul %7, %9, %cst_9 {dimension_numbers = #tpu.dot_dimension_numbers<[1], [0], [0], [1], [0, 0, 1, 1], [], []>} : vector<16x64xf32>, vector<64x32xf32>, vector<16x32xf32> -> vector<16x32xf32>
    %cst_10 = arith.constant 0.000000e+00 : f32
    %11 = vector.broadcast %cst_10 : f32 to vector<16x32xf32>
    %12 = arith.cmpf ogt, %10, %11 : vector<16x32xf32>
    %cst_11 = arith.constant 0.00999999977 : f32
    %13 = vector.broadcast %cst_11 : f32 to vector<16x32xf32>
    %14 = arith.mulf %13, %10 : vector<16x32xf32>
    %15 = arith.select %12, %10, %14 : vector<16x32xi1>, vector<16x32xf32>
    %c0_12 = arith.constant 0 : index
    %c0_13 = arith.constant 0 : index
    %16 = vector.load %arg5[%c0_12, %c0_13] : memref<16x32xf32, #tpu.memory_space<vmem>>, vector<16x32xf32>
    tpu.vector_store %arg5[%c0_12, %c0_13], %15 {strides = array<i32>} : memref<16x32xf32, #tpu.memory_space<vmem>>, vector<16x32xf32>,
    return
  }
  func.func @transform_0(%arg0: i32) -> (i32, i32) {
    %c0_i32 = arith.constant 0 : i32
    %c0_i32_0 = arith.constant 0 : i32
    return %arg0, %c0_i32 : i32, i32
  }
  func.func @transform_1(%arg0: i32) -> (i32, i32) {
    %c0_i32 = arith.constant 0 : i32
    %c0_i32_0 = arith.constant 0 : i32
    %c0_i32_1 = arith.constant 0 : i32
    return %c0_i32, %c0_i32_0 : i32, i32
  }
  func.func @transform_2(%arg0: i32) -> (i32, i32) {
    %c0_i32 = arith.constant 0 : i32
    %c0_i32_0 = arith.constant 0 : i32
    %c0_i32_1 = arith.constant 0 : i32
    return %c0_i32, %c0_i32_0 : i32, i32
  }
  func.func @transform_3(%arg0: i32) -> (i32, i32) {
    %c0_i32 = arith.constant 0 : i32
    %c0_i32_0 = arith.constant 0 : i32
    return %arg0, %c0_i32 : i32, i32
  }
  func.func @transform_4(%arg0: i32) -> (i32, i32) {
    %c0_i32 = arith.constant 0 : i32
    %c0_i32_0 = arith.constant 0 : i32
    return %arg0, %c0_i32 : i32, i32
  }
}

</mosaic_0001>

<llo_original>
// kernel: tpu_custom_call.1
$region0: #{tpu_custom_call.1}
  #allocation0 [shape = 'u32[]', space=smem, size = 0x4, offset = 0x4, fixed_abs, tag = 'smem constant byte address 0x4 - core index']
  #allocation1 [shape = 'u32[72,128]{1,0:T(1,128)}', space=vmem, size = 0x9000, scoped, tag = 'internal scratch']
  %s0 = inlined_call_operand.vmem [shape: f32[16,32], index: 0, kind: input, shape index: {}]
  %s1 = inlined_call_operand.vmem [shape: f32[32,64], index: 1, kind: input, shape index: {}]
  %s2 = inlined_call_operand.vmem [shape: f32[64,32], index: 2, kind: input, shape index: {}]
  %s3 = inlined_call_operand.hbm [shape: f32[16,64], index: 3, kind: output, shape index: {0}]
  %s4 = inlined_call_operand.hbm [shape: f32[16,32], index: 4, kind: output, shape index: {1}]
  %5 = xla_tuple %s3, %s4
  %s6 = sld [smem:[#allocation0]]
  $region30: #{tpu_custom_call.1} parent=0
    _
  %s8 = ssub.s32 1, %s6
  %s9 = scalar_select 0, %s8, %s6
  $region1: #{tpu_custom_call.1} parent=0
    #allocation2 [shape = 'u8[8192]{0}', space=vmem, size = 0x2000, scoped, tag = 'output window, operand 0, single buffered']
    #allocation3 [shape = 's32[1]{0}', space=sflag, size = 0x4, scoped, tag = 'scoped memory for tpu_custom_call.1']
    #allocation4 [shape = 'u8[8192]{0}', space=vmem, size = 0x2000, scoped, tag = 'output window, operand 1, single buffered']
    #allocation5 [shape = 's32[1]{0}', space=sflag, size = 0x4, scoped, tag = 'scoped memory for tpu_custom_call.1']
    %10 = vsyncpa [#allocation3], 0
    %11 = vsyncpa [#allocation5], 0
    // Predicated region
    $region2: #{tpu_custom_call.1} parent=1 // pred_check
      _
    $region3: #{tpu_custom_call.1} parent=1 // pred_check_branch
      %13 = sbr.rel (0) target = $region5
    $region4: #{tpu_custom_call.1} parent=1 // pred_region
      _
    $region5: #{tpu_custom_call.1} parent=1 // pred_fallthru
      _
    // Predicated region
    $region6: #{tpu_custom_call.1} parent=1 // pred_check
      _
    $region7: #{tpu_custom_call.1} parent=1 // pred_check_branch
      %15 = sbr.rel (0) target = $region9
    $region8: #{tpu_custom_call.1} parent=1 // pred_region
      _
    $region9: #{tpu_custom_call.1} parent=1 // pred_fallthru
      _
    // Predicated region
    $region10: #{tpu_custom_call.1} parent=1 // pred_check
      _
    $region11: #{tpu_custom_call.1} parent=1 // pred_check_branch
      %17 = sbr.rel (0) target = $region13
    $region12: #{tpu_custom_call.1} parent=1 // pred_region
      _
    $region13: #{tpu_custom_call.1} parent=1 // pred_fallthru
      _
    %v18 = vld [vmem:[%s0] sm:$0xff]
    %v19 = vld [vmem:[%s0 + $0x8] sm:$0xff]
    %v20 = vld [vmem:[%s1] sm:$0xff]
    %v21 = vld [vmem:[%s1 + $0x8] sm:$0xff]
    %v22 = vld [vmem:[%s1 + $0x10] sm:$0xff]
    %v23 = vld [vmem:[%s1 + $0x18] sm:$0xff]
    %vm24 = vcmask 261120
    %v26 = vsel %vm24, %v18, 0
    %v29 = vsel %vm24, %v19, 0
    %31 = vmatpush.msra.mxu0 0.0
    %32 = vmatpush.msra.mxu0 0.0
    %33 = vmatpush.msra.mxu0 0.0
    %34 = vmatpush.msra.mxu0 0.0
    %35 = vmatpush.msra.mxu0 0.0
    %36 = vmatpush.msra.mxu0 0.0
    %37 = vmatpush.msra.mxu0 0.0
    %38 = vmatpush.msra.mxu0 0.0
    %39 = vmatpush.msra.mxu0 0.0
    %40 = vmatpush.msra.mxu0 0.0
    %41 = vmatpush.msra.mxu0 0.0
    %42 = vmatpush.msra.mxu0 0.0
    %43 = vmatpush.msra.mxu0 %v23
    %44 = vmatpush.msra.mxu0 %v22
    %45 = vmatpush.msra.mxu0 %v21
    %46 = vmatpush.msra.mxu0 %v20
    %47 = vmatmul.f32.gmra.mxu0 %v26
    %v48 = vpop.f32.mrf.mxu0
    %v49 = vadd.f32 0.0, %v48
    %50 = vmatmul.f32.gmra.mxu0 %v29
    %v51 = vpop.f32.mrf.mxu0
    %v52 = vadd.f32 0.0, %v51
    %53 = vdwg.mxu0
    %vm54 = vcmp.gt.f32.partialorder %v49, 0.0
    %vm55 = vcmp.gt.f32.partialorder %v52, 0.0
    %v56 = vmul.f32 %v49, 0.01
    %v57 = vmul.f32 %v52, 0.01
    %v58 = vsel %vm54, %v49, %v56
    %v59 = vsel %vm55, %v52, %v57
    %vm60 = vcmask 523264
    %61 = vst.msk [vmem:[#allocation2] sm:$0xff] %vm60, %v58
    %62 = vst.msk [vmem:[#allocation2 + $0x8] sm:$0xff] %vm60, %v59
    %v63 = vld [vmem:[%s2] sm:$0xff]
    %v64 = vld [vmem:[%s2 + $0x8] sm:$0xff]
    %v65 = vld [vmem:[%s2 + $0x10] sm:$0xff]
    %v66 = vld [vmem:[%s2 + $0x18] sm:$0xff]
    %v67 = vld [vmem:[%s2 + $0x20] sm:$0xff]
    %v68 = vld [vmem:[%s2 + $0x28] sm:$0xff]
    %v69 = vld [vmem:[%s2 + $0x30] sm:$0xff]
    %v70 = vld [vmem:[%s2 + $0x38] sm:$0xff]
    %v72 = vsel %vm60, %v58, 0
    %v75 = vsel %vm60, %v59, 0
    %77 = vmatpush.msra.mxu0 0.0
    %78 = vmatpush.msra.mxu0 0.0
    %79 = vmatpush.msra.mxu0 0.0
    %80 = vmatpush.msra.mxu0 0.0
    %81 = vmatpush.msra.mxu0 0.0
    %82 = vmatpush.msra.mxu0 0.0
    %83 = vmatpush.msra.mxu0 0.0
    %84 = vmatpush.msra.mxu0 0.0
    %85 = vmatpush.msra.mxu0 %v70
    %86 = vmatpush.msra.mxu0 %v69
    %87 = vmatpush.msra.mxu0 %v68
    %88 = vmatpush.msra.mxu0 %v67
    %89 = vmatpush.msra.mxu0 %v66
    %90 = vmatpush.msra.mxu0 %v65
    %91 = vmatpush.msra.mxu0 %v64
    %92 = vmatpush.msra.mxu0 %v63
    %93 = vmatmul.f32.gmra.mxu0 %v72
    %v94 = vpop.f32.mrf.mxu0
    %v95 = vadd.f32 0.0, %v94
    %96 = vmatmul.f32.gmra.mxu0 %v75
    %v97 = vpop.f32.mrf.mxu0
    %v98 = vadd.f32 0.0, %v97
    %99 = vdwg.mxu0
    %vm100 = vcmp.gt.f32.partialorder %v95, 0.0
    %vm101 = vcmp.gt.f32.partialorder %v98, 0.0
    %v102 = vmul.f32 %v95, 0.01
    %v103 = vmul.f32 %v98, 0.01
    %v104 = vsel %vm100, %v95, %v102
    %v105 = vsel %vm101, %v98, %v103
    %106 = vst.msk [vmem:[#allocation4] sm:$0xff] %vm24, %v104
    %107 = vst.msk [vmem:[#allocation4 + $0x8] sm:$0xff] %vm24, %v105
    // Predicated region
    $region14: #{tpu_custom_call.1} parent=1 // pred_check
      _
    $region15: #{tpu_custom_call.1} parent=1 // pred_check_branch
      %109 = sbr.rel (0) target = $region17
    $region16: #{tpu_custom_call.1} parent=1 // pred_region
      %111 = vsyncadd [#allocation3], 0
      %s112 = sshll.u32 [#allocation2], 4
      %s113 = int_to_ptr.vmem [resolvable:$true] %s112
      %s114 = sshll.u32 %s3, 4
      %s115 = int_to_ptr.hbm [resolvable:$true] %s114
      %120 = dma.vmem_to_hbm [thread:$0]  %s113, 256, %s115, [#allocation3], 128, 128, 8
    $region17: #{tpu_custom_call.1} parent=1 // pred_fallthru
      _
    // Predicated region
    $region18: #{tpu_custom_call.1} parent=1 // pred_check
      _
    $region19: #{tpu_custom_call.1} parent=1 // pred_check_branch
      %122 = sbr.rel (0) target = $region21
    $region20: #{tpu_custom_call.1} parent=1 // pred_region
      %124 = vsyncadd [#allocation5], 0
      %s125 = sshll.u32 [#allocation4], 4
      %s126 = int_to_ptr.vmem [resolvable:$true] %s125
      %s127 = sshll.u32 %s4, 4
      %s128 = int_to_ptr.hbm [resolvable:$true] %s127
      %133 = dma.vmem_to_hbm [thread:$0]  %s126, 256, %s128, [#allocation5], 128, 128, 8
    $region21: #{tpu_custom_call.1} parent=1 // pred_fallthru
      _
    // Predicated region
    $region22: #{tpu_custom_call.1} parent=1 // pred_check
      _
    $region23: #{tpu_custom_call.1} parent=1 // pred_check_branch
      %135 = sbr.rel (0) target = $region25
    $region24: #{tpu_custom_call.1} parent=1 // pred_region
      %137 = dma.done [#allocation3], 256
    $region25: #{tpu_custom_call.1} parent=1 // pred_fallthru
      _
    // Predicated region
    $region26: #{tpu_custom_call.1} parent=1 // pred_check
      _
    $region27: #{tpu_custom_call.1} parent=1 // pred_check_branch
      %139 = sbr.rel (0) target = $region29
    $region28: #{tpu_custom_call.1} parent=1 // pred_region
      %141 = dma.done [#allocation5], 256
    $region29: #{tpu_custom_call.1} parent=1 // pred_fallthru
      _
    %142 = vsyncpa [#allocation3], 1
    %143 = vsyncpa [#allocation5], 1

</llo_original>
